<compile_context>
chip_gen: v5e
topology: v5e:2x2
jax: 0.10.0
libtpu: 0.0.40
codegen_flags: <defaults>
</compile_context>

<pallas_src>
import numpy as np
import jax
import jax.numpy as jnp
from jax.experimental import pallas as pl
from jax.experimental.pallas import tpu as pltpu


def _linear_kernel_f32_out(x_ref, w_ref, b_ref, o_ref):
    # x_ref: (tm, tk)  activation block (compute dtype, e.g. bf16)
    # w_ref: (tk, tn)  block of weight^T (In, Out layout) -> plain A @ B MXU feed
    # b_ref: (1,  tn)  f32 bias block
    # o_ref: (tm, tn)  f32 output block; index_map ignores k so it is resident across K
    k = pl.program_id(2)

    @pl.when(k == 0)
    def _():
        # Fold bias into the accumulator init (output block doubles as the accumulator).
        o_ref[...] = jnp.broadcast_to(b_ref[...].astype(jnp.float32), o_ref.shape)

    o_ref[...] += jnp.dot(x_ref[...], w_ref[...], preferred_element_type=jnp.float32)


def _linear_kernel_acc(x_ref, w_ref, b_ref, o_ref, acc_ref):
    # Variant with an explicit f32 VMEM accumulator, used when the output dtype is not
    # f32 (e.g. bf16 activations in / bf16 out).
    k = pl.program_id(2)

    @pl.when(k == 0)
    def _():
        acc_ref[...] = jnp.broadcast_to(b_ref[...].astype(jnp.float32), acc_ref.shape)

    acc_ref[...] += jnp.dot(x_ref[...], w_ref[...], preferred_element_type=jnp.float32)

    @pl.when(k == pl.num_programs(2) - 1)
    def _():
        o_ref[...] = acc_ref[...].astype(o_ref.dtype)


def _pick_tile(dim, preferred, align):
    """Largest divisor of `dim` that is a multiple of `align` and <= `preferred`.

    Falls back to the full dimension (always a legal block) only when no aligned divisor
    exists — i.e. small dims, where a full-dim block is cheap anyway.
    # TODO(synk): pad truly huge non-factorable dims instead of full-dim fallback.
    """
    d = min(preferred, dim)
    d -= d % align
    while d >= align:
        if dim % d == 0:
            return d
        d -= align
    return dim


def linear_forward(x, weight, bias, *, tm=512, tn=512, tk=2048,
                   compute_dtype=jnp.bfloat16):
    """y = x @ weight.T + bias, matching torch.nn.Linear semantics."""
    B, In = x.shape
    Out, In_w = weight.shape
    assert In == In_w, "weight input dim mismatch"
    assert bias.shape == (Out,)

    out_dtype = x.dtype
    if compute_dtype is None:
        compute_dtype = x.dtype
    out_is_f32 = np.dtype(out_dtype) == np.dtype(np.float32)

    # --- tile selection (lane dims 128-aligned, sublane dim 8-aligned) ---
    tm = _pick_tile(B, tm, 8)
    tn = _pick_tile(Out, tn, 128)
    tk = _pick_tile(In, tk, 128)

    # Keep both v7x TensorCores busy: if M and N grids both collapsed to 1, split Out.
    if (B // tm) == 1 and (Out // tn) == 1 and Out % 256 == 0:
        tn = _pick_tile(Out, max(Out // 2, 128), 128)

    grid = (B // tm, Out // tn, In // tk)  # K (reduction) innermost

    # --- operand prep (done once per call in the wrapper, amortized) ---
    x_c = x.astype(compute_dtype)
    w_t = weight.T.astype(compute_dtype)          # (In, Out): plain A @ B feed to the MXU
    b2 = bias.reshape(1, Out).astype(jnp.float32)  # lane-major, folded into acc init

    # Deeper weight buffering only for the small-batch weight-streaming regime.
    use_buffered_w = (tm <= 128) and (In // tk) >= 3
    if use_buffered_w:
        w_spec = pl.BlockSpec((tk, tn), lambda i, j, k: (k, j),
                              pipeline_mode=pl.Buffered(3))
    else:
        w_spec = pl.BlockSpec((tk, tn), lambda i, j, k: (k, j))

    if out_is_f32:
        kernel = _linear_kernel_f32_out
        scratch_shapes = []
    else:
        kernel = _linear_kernel_acc
        scratch_shapes = [pltpu.VMEM((tm, tn), jnp.float32)]

    # --- explicit VMEM budget: 2x the estimated footprint, >=32 MiB, capped at 64 MiB so
    #     it stays legal on v7x (64 MiB physical) while overriding the 16/32 MiB scoped
    #     defaults on v5e/v6e. ---
    in_bytes = np.dtype(compute_dtype).itemsize
    ob = np.dtype(out_dtype).itemsize
    w_bufs = 3 if use_buffered_w else 2
    est = (2 * tm * tk * in_bytes          # x double buffer
           + w_bufs * tk * tn * in_bytes   # weight buffers
           + 2 * tn * 4                    # bias
           + 2 * tm * tn * ob              # output block buffers
           + (0 if out_is_f32 else tm * tn * 4))  # acc scratch
    vmem_limit = int(min(64 * 1024 * 1024, max(32 * 1024 * 1024, 2 * est)))

    return pl.pallas_call(
        kernel,
        out_shape=jax.ShapeDtypeStruct((B, Out), out_dtype),
        grid_spec=pltpu.PrefetchScalarGridSpec(
            num_scalar_prefetch=0,
            grid=grid,
            in_specs=[
                pl.BlockSpec((tm, tk), lambda i, j, k: (i, k)),   # x
                w_spec,                                           # weight^T (In, Out)
                pl.BlockSpec((1, tn), lambda i, j, k: (0, j)),    # bias
            ],
            out_specs=pl.BlockSpec((tm, tn), lambda i, j, k: (i, j)),
            scratch_shapes=scratch_shapes,
        ),
        compiler_params=pltpu.CompilerParams(
            dimension_semantics=("parallel", "parallel", "arbitrary"),
            vmem_limit_bytes=vmem_limit,
        ),
    )(x_c, w_t, b2)


if __name__ == "__main__":
    # ---- Small shapes consistent with the module: input_size=32, output_size=16, batch=8
    batch, input_size, output_size = 8, 32, 16

    key = jax.random.PRNGKey(0)
    kx, kw, kb = jax.random.split(key, 3)

    # Deterministic init (mimics nn.Linear uniform(-1/sqrt(In), 1/sqrt(In)))
    bound = 1.0 / jnp.sqrt(jnp.float32(input_size))
    weight = jax.random.uniform(kw, (output_size, input_size), jnp.float32,
                                minval=-bound, maxval=bound)
    bias = jax.random.uniform(kb, (output_size,), jnp.float32,
                              minval=-bound, maxval=bound)
    x = jax.random.normal(kx, (batch, input_size), jnp.float32)

    y = linear_forward(x, weight, bias)
    jax.block_until_ready(y)

    y_ref = x @ weight.T + bias          # f32 reference (nn.Linear semantics)
    assert y.shape == (batch, output_size)
    assert jnp.allclose(y, y_ref, atol=3e-2, rtol=3e-2)  # bf16 compute, f32 accumulate

    # ---- Larger tile-aligned shape so the M/N/K grid (>1 per axis) exercises the
    #      resident-output accumulation, both pl.when branches, and megacore sharding.
    B2, In2, Out2 = 1024, 4096, 1024
    k2x, k2w, k2b = jax.random.split(jax.random.PRNGKey(1), 3)
    x2 = jax.random.normal(k2x, (B2, In2), jnp.float32)
    w2 = jax.random.normal(k2w, (Out2, In2), jnp.float32) * 0.02
    b2 = jax.random.normal(k2b, (Out2,), jnp.float32)
    y2 = linear_forward(x2, w2, b2)
    jax.block_until_ready(y2)
    y2_ref = x2 @ w2.T + b2
    assert jnp.allclose(y2, y2_ref, atol=5e-2, rtol=5e-2)

    # ---- Non-f32 output path (scratch-accumulator kernel variant).
    B3, In3, Out3 = 16, 256, 256
    k3x, k3w, k3b = jax.random.split(jax.random.PRNGKey(2), 3)
    bound3 = 1.0 / jnp.sqrt(jnp.float32(In3))
    x3 = jax.random.normal(k3x, (B3, In3), jnp.bfloat16)
    w3 = jax.random.uniform(k3w, (Out3, In3), jnp.float32, minval=-bound3, maxval=bound3)
    b3 = jax.random.uniform(k3b, (Out3,), jnp.float32, minval=-bound3, maxval=bound3)
    y3 = linear_forward(x3, w3, b3)
    jax.block_until_ready(y3)
    y3_ref = x3.astype(jnp.float32) @ w3.T + b3
    assert jnp.allclose(y3.astype(jnp.float32), y3_ref, atol=5e-2, rtol=5e-2)

    # TODO(synk): tv_l1_regularization (weight-only training penalty, not in forward path)

    print("KERNEL_OK")
</pallas_src>

<mosaic_0001>
module attributes {stable_mosaic.version = 11 : i64} {
  func.func @_linear_kernel_f32_out(%arg0: i32, %arg1: i32, %arg2: i32, %arg3: memref<8x32xbf16, #tpu.memory_space<vmem>>, %arg4: memref<32x16xbf16, #tpu.memory_space<vmem>>, %arg5: memref<1x16xf32, #tpu.memory_space<vmem>>, %arg6: memref<8x16xf32, #tpu.memory_space<vmem>>) attributes {dimension_semantics = [#tpu.dimension_semantics<parallel>, #tpu.dimension_semantics<parallel>, #tpu.dimension_semantics<arbitrary>], iteration_bounds = array<i64: 1, 1, 1>, scalar_prefetch = 0 : i64, scratch_operands = 0 : i64, tpu.core_type = #tpu.core_type<tc>, window_params = [{transform_indices = @transform_0, window_bounds = array<i64: 8, 32>}, {transform_indices = @transform_1, window_bounds = array<i64: 32, 16>}, {transform_indices = @transform_2, window_bounds = array<i64: 1, 16>}, {transform_indices = @transform_3, window_bounds = array<i64: 8, 16>}]} {
    %c0_i32 = arith.constant 0 : i32
    %0 = arith.cmpi eq, %arg2, %c0_i32 : i32
    %1 = arith.extui %0 : i1 to i32
    %c0_i32_0 = arith.constant 0 : i32
    %2 = arith.cmpi ne, %1, %c0_i32_0 : i32
    scf.if %2 {
      %c0_8 = arith.constant 0 : index
      %c0_9 = arith.constant 0 : index
      %9 = vector.load %arg5[%c0_8, %c0_9] : memref<1x16xf32, #tpu.memory_space<vmem>>, vector<1x16xf32>
      %10 = vector.shape_cast %9 : vector<1x16xf32> to vector<1x16xf32>
      %11 = vector.broadcast %10 : vector<1x16xf32> to vector<8x16xf32>
      %c0_10 = arith.constant 0 : index
      %c0_11 = arith.constant 0 : index
      %12 = vector.load %arg6[%c0_10, %c0_11] : memref<8x16xf32, #tpu.memory_space<vmem>>, vector<8x16xf32>
      tpu.vector_store %arg6[%c0_10, %c0_11], %11 {strides = array<i32>} : memref<8x16xf32, #tpu.memory_space<vmem>>, vector<8x16xf32>,
    } else {
    }
    %c0 = arith.constant 0 : index
    %c0_1 = arith.constant 0 : index
    %3 = vector.load %arg6[%c0, %c0_1] : memref<8x16xf32, #tpu.memory_space<vmem>>, vector<8x16xf32>
    %c0_2 = arith.constant 0 : index
    %c0_3 = arith.constant 0 : index
    %4 = vector.load %arg3[%c0_2, %c0_3] : memref<8x32xbf16, #tpu.memory_space<vmem>>, vector<8x32xbf16>
    %c0_4 = arith.constant 0 : index
    %c0_5 = arith.constant 0 : index
    %5 = vector.load %arg4[%c0_4, %c0_5] : memref<32x16xbf16, #tpu.memory_space<vmem>>, vector<32x16xbf16>
    %cst = arith.constant dense<0.000000e+00> : vector<8x16xf32>
    %6 = tpu.matmul %4, %5, %cst {dimension_numbers = #tpu.dot_dimension_numbers<[1], [0], [0], [1], [0, 0, 1, 1], [], []>} : vector<8x32xbf16>, vector<32x16xbf16>, vector<8x16xf32> -> vector<8x16xf32>
    %7 = arith.addf %3, %6 : vector<8x16xf32>
    %c0_6 = arith.constant 0 : index
    %c0_7 = arith.constant 0 : index
    %8 = vector.load %arg6[%c0_6, %c0_7] : memref<8x16xf32, #tpu.memory_space<vmem>>, vector<8x16xf32>
    tpu.vector_store %arg6[%c0_6, %c0_7], %7 {strides = array<i32>} : memref<8x16xf32, #tpu.memory_space<vmem>>, vector<8x16xf32>,
    return
  }
  func.func @transform_0(%arg0: i32, %arg1: i32, %arg2: i32) -> (i32, i32) {
    %c0_i32 = arith.constant 0 : i32
    return %arg0, %arg2 : i32, i32
  }
  func.func @transform_1(%arg0: i32, %arg1: i32, %arg2: i32) -> (i32, i32) {
    %c0_i32 = arith.constant 0 : i32
    return %arg2, %arg1 : i32, i32
  }
  func.func @transform_2(%arg0: i32, %arg1: i32, %arg2: i32) -> (i32, i32) {
    %c0_i32 = arith.constant 0 : i32
    %c0_i32_0 = arith.constant 0 : i32
    return %c0_i32, %arg1 : i32, i32
  }
  func.func @transform_3(%arg0: i32, %arg1: i32, %arg2: i32) -> (i32, i32) {
    %c0_i32 = arith.constant 0 : i32
    return %arg0, %arg1 : i32, i32
  }
}

</mosaic_0001>

<llo_original>
// kernel: tpu_custom_call.1
$region0: #{tpu_custom_call.1}
  #allocation0 [shape = 'u32[]', space=smem, size = 0x4, offset = 0x4, fixed_abs, tag = 'smem constant byte address 0x4 - core index']
  #allocation1 [shape = 'u32[72,128]{1,0:T(1,128)}', space=vmem, size = 0x9000, scoped, tag = 'internal scratch']
  %s0 = inlined_call_operand.vmem [shape: bf16[8,32], index: 0, kind: input, shape index: {}]
  %s1 = inlined_call_operand.vmem [shape: bf16[32,16], index: 1, kind: input, shape index: {}]
  %s2 = inlined_call_operand.vmem [shape: f32[1,16], index: 2, kind: input, shape index: {}]
  %s3 = inlined_call_operand.hbm [shape: f32[8,16], index: 3, kind: output, shape index: {}]
  %s4 = sld [smem:[#allocation0]]
  $region26: #{tpu_custom_call.1} parent=0
    _
  %s6 = ssub.s32 1, %s4
  %s7 = scalar_select 0, %s6, %s4
  $region1: #{tpu_custom_call.1} parent=0
    #allocation2 [shape = 'u8[4096]{0}', space=vmem, size = 0x1000, scoped, tag = 'output window, operand 0, single buffered']
    #allocation3 [shape = 's32[1]{0}', space=sflag, size = 0x4, scoped, tag = 'scoped memory for tpu_custom_call.1']
    %8 = vsyncpa [#allocation3], 0
    // Predicated region
    $region2: #{tpu_custom_call.1} parent=1 // pred_check
      _
    $region3: #{tpu_custom_call.1} parent=1 // pred_check_branch
      %10 = sbr.rel (0) target = $region5
    $region4: #{tpu_custom_call.1} parent=1 // pred_region
      _
    $region5: #{tpu_custom_call.1} parent=1 // pred_fallthru
      _
    // Predicated region
    $region6: #{tpu_custom_call.1} parent=1 // pred_check
      _
    $region7: #{tpu_custom_call.1} parent=1 // pred_check_branch
      %12 = sbr.rel (0) target = $region9
    $region8: #{tpu_custom_call.1} parent=1 // pred_region
      _
    $region9: #{tpu_custom_call.1} parent=1 // pred_fallthru
      _
    // Predicated region
    $region10: #{tpu_custom_call.1} parent=1 // pred_check
      _
    $region11: #{tpu_custom_call.1} parent=1 // pred_check_branch
      %14 = sbr.rel (0) target = $region13
    $region12: #{tpu_custom_call.1} parent=1 // pred_region
      _
    $region13: #{tpu_custom_call.1} parent=1 // pred_fallthru
      _
    %p16 = scmp.eq.s32.totalorder 0, 0
    // Predicated region
    $region14: #{tpu_custom_call.1} parent=1 // pred_check
      %p17 = pneg %p16
    $region15: #{tpu_custom_call.1} parent=1 // pred_check_branch
      %19 = sbr.rel (%p17) target = $region17
    $region16: #{tpu_custom_call.1} parent=1 // pred_region
      %v20 = vld [vmem:[%s2] sm:$0x1]
      %v22 = vperm.slane %v20, 0
      %vm24 = vcmask 130048
      %25 = vst.msk [vmem:[#allocation2] sm:$0xff] %vm24, %v22
    $region17: #{tpu_custom_call.1} parent=1 // pred_fallthru
      _
    %v26 = vld [vmem:[#allocation2] sm:$0xff]
    %v27 = vld [vmem:[%s0] sm:$0xf]
    %v28 = vld [vmem:[%s1] sm:$0xf]
    %v29 = vld [vmem:[%s1 + $0x4] sm:$0xf]
    %v30 = vld [vmem:[%s1 + $0x8] sm:$0xf]
    %v31 = vld [vmem:[%s1 + $0xc] sm:$0xf]
    %v36 = vunpack.c.l.b16 %v28
    %v37 = vunpack.c.l.b16 %v29
    %v38 = vunpack.c.l.b16 %v30
    %v39 = vunpack.c.l.b16 %v31
    %v40 = vpack.c.b16 %v37, %v36
    %v41 = vpack.c.b16 %v39, %v38
    %vm44 = vcmask 261120
    %v46 = vsel %vm44, %v27, 0
    %48 = vmatpush.bf16.msra.mxu0 0
    %49 = vmatpush.bf16.msra.mxu0 0
    %50 = vmatpush.bf16.msra.mxu0 0
    %51 = vmatpush.bf16.msra.mxu0 0
    %52 = vmatpush.bf16.msra.mxu0 0
    %53 = vmatpush.bf16.msra.mxu0 0
    %54 = vmatpush.bf16.msra.mxu0 %v41
    %55 = vmatpush.bf16.msra.mxu0 %v40
    %56 = vmatmul.bf16.gmra.mxu0 %v46
    %v57 = vpop.f32.mrf.mxu0
    %v58 = vadd.f32 0.0, %v57
    %v59 = vpop.f32.mrf.mxu0
    %60 = vdwg.mxu0
    %v61 = vadd.f32 %v26, %v58
    %vm62 = vcmask 130048
    %63 = vst.msk [vmem:[#allocation2] sm:$0xff] %vm62, %v61
    // Predicated region
    $region18: #{tpu_custom_call.1} parent=1 // pred_check
      _
    $region19: #{tpu_custom_call.1} parent=1 // pred_check_branch
      %65 = sbr.rel (0) target = $region21
    $region20: #{tpu_custom_call.1} parent=1 // pred_region
      %67 = vsyncadd [#allocation3], 0
      %s69 = sshll.u32 [#allocation2], 4
      %s70 = int_to_ptr.vmem [resolvable:$true] %s69
      %s71 = sshll.u32 %s3, 4
      %s72 = int_to_ptr.hbm [resolvable:$true] %s71
      %74 = dma.vmem_to_hbm [thread:$0]  %s70, 128, %s72, [#allocation3]
    $region21: #{tpu_custom_call.1} parent=1 // pred_fallthru
      _
    // Predicated region
    $region22: #{tpu_custom_call.1} parent=1 // pred_check
      _
    $region23: #{tpu_custom_call.1} parent=1 // pred_check_branch
      %76 = sbr.rel (0) target = $region25
    $region24: #{tpu_custom_call.1} parent=1 // pred_region
      %78 = dma.done [#allocation3], 128
    $region25: #{tpu_custom_call.1} parent=1 // pred_fallthru
      _
    %79 = vsyncpa [#allocation3], 1

</llo_original>
